<compile_context>
chip_gen: v6e
topology: v6e:2x2x1
jax: 0.10.0
libtpu: 0.0.40
codegen_flags: <defaults>
</compile_context>

<pallas_src>
import math
import functools

import jax
import jax.numpy as jnp
from jax import lax
from jax.experimental import pallas as pl
from jax.experimental.pallas import tpu as pltpu


def _round_up(x, m):
    return ((x + m - 1) // m) * m


def _gelu_exact(x):
    # matches torch erf-based gelu: x * 0.5 * (1 + erf(x / sqrt(2)))
    return x * 0.5 * (1.0 + lax.erf(x / math.sqrt(2.0)))


def _tpu_vmem_and_name():
    """Best-effort hardware query; safe fallbacks if unavailable."""
    vmem_cap = 64 * 1024 * 1024          # conservative default (v7x per-TC)
    name = ""
    try:
        info = pltpu.get_tpu_info()
        vmem_cap = int(getattr(info, "vmem_capacity_bytes", vmem_cap))
        name = str(getattr(info, "chip_version", "") or getattr(info, "name", ""))
    except Exception:
        pass
    return vmem_cap, name


def _default_tiles(vmem_cap, chip_name):
    """Generation-aware default (tile_m, tile_v)."""
    n = chip_name.lower()
    if "v5" in n:
        return 512, 2048                 # v5e roofline ~240 FLOP/byte: 512 rows suffice
    # v6e (needs big tm) and v7x (1024x2048 f32-out ~34 MiB, fits 64 MiB) and unknown
    return 1024, 2048


def lm_head_kernel(x_ref, wd_ref, bd_ref, gamma_ref, beta_ref,
                   wdec_ref, bdec_ref, o_ref, t_scratch, *, eps):
    """Grid = (row_tiles, vocab_tiles); vocab is the inner ("arbitrary") axis.

    At vocab tile j == 0 the transform (dense + gelu + LayerNorm) runs for the
    current row tile (narrow-dtype matmul operands, f32 accumulation / LN) and
    the post-LN result is cached in VMEM scratch; every vocab tile then does
    the decoder matmul against its pre-transposed [H, TV] weight slice + bias.
    """
    j = pl.program_id(1)

    @pl.when(j == 0)
    def _():
        # dense: x @ Wd  (Wd already transposed to [in, out] in the wrapper)
        h = jnp.dot(x_ref[...], wd_ref[...],
                    preferred_element_type=jnp.float32)        # [TM, H] f32
        h = h + bd_ref[...]                                    # broadcast [1, H]
        h = _gelu_exact(h)
        mean = jnp.mean(h, axis=-1, keepdims=True)
        var = jnp.mean(jnp.square(h - mean), axis=-1, keepdims=True)
        h = (h - mean) * lax.rsqrt(var + eps)
        h = h * gamma_ref[...] + beta_ref[...]
        t_scratch[...] = h.astype(t_scratch.dtype)             # cast AFTER f32 LayerNorm

    # decoder: t @ W_emb^T, with W_emb pre-transposed to [H, V] in the wrapper.
    logits = jnp.dot(t_scratch[...], wdec_ref[...],
                     preferred_element_type=jnp.float32)       # [TM, TV] f32
    o_ref[...] = (logits + bdec_ref[...]).astype(o_ref.dtype)


def bert_lm_prediction_head(hidden_states, params, *, eps=1e-12,
                            tile_m=None, tile_v=None,
                            transform_dtype=jnp.bfloat16,
                            decoder_dtype=jnp.bfloat16,
                            out_dtype=None):
    """hidden_states: [B, S, H] float32. Returns logits [B, S, V] (out_dtype)."""
    B, S, H = hidden_states.shape
    wd = params["dense_w"]        # [H, H]  (torch nn.Linear layout: [out, in])
    bd = params["dense_b"]        # [H]
    gamma = params["ln_gamma"]    # [H]
    beta = params["ln_beta"]      # [H]
    w_emb = params["decoder_w"]   # [V, H]  (tied embedding weights)
    b_dec = params["decoder_b"]   # [V]
    V = w_emb.shape[0]

    if out_dtype is None:
        out_dtype = hidden_states.dtype

    vmem_cap, chip_name = _tpu_vmem_and_name()
    d_tm, d_tv = _default_tiles(vmem_cap, chip_name)
    if tile_m is None:
        tile_m = d_tm
    if tile_v is None:
        tile_v = d_tv

    M = B * S
    x2d = hidden_states.reshape(M, H).astype(transform_dtype)

    # Effective tile sizes: respect (8, 128) tiling, never exceed the
    # (rounded-up) problem size; pad ragged M / V and slice off at the end.
    tm = min(tile_m, _round_up(M, 8))
    tv = min(tile_v, _round_up(V, 128))
    Mp = _round_up(M, tm)
    Vp = _round_up(V, tv)

    if Mp != M:
        x2d = jnp.pad(x2d, ((0, Mp - M), (0, 0)))

    # One-time host-side relayouts (amortized across all calls / grid steps):
    #   dense W  [out, in] -> [in, out];  decoder W [V, H] -> [H, V]
    wd_t = wd.T.astype(transform_dtype)                 # [H, H]
    wdec_t = w_emb.T.astype(decoder_dtype)              # [H, V]
    bdec = b_dec.astype(jnp.float32)
    if Vp != V:
        wdec_t = jnp.pad(wdec_t, ((0, 0), (0, Vp - V)))
        bdec = jnp.pad(bdec, (0, Vp - V))

    bd2 = bd.reshape(1, H).astype(jnp.float32)
    gamma2 = gamma.reshape(1, H).astype(jnp.float32)
    beta2 = beta.reshape(1, H).astype(jnp.float32)
    bdec2 = bdec.reshape(1, Vp)

    grid = (Mp // tm, Vp // tv)

    x_bytes = jnp.dtype(transform_dtype).itemsize
    dec_bytes = jnp.dtype(decoder_dtype).itemsize
    out_bytes = jnp.dtype(out_dtype).itemsize

    # VMEM budget: double-buffered in/out blocks + persistent scratch, with
    # headroom, capped at 7/8 of the *actual* physical VMEM of this generation
    # (no flat 64-MiB cap penalizing 128-MiB parts, no full-VMEM limit on v7x).
    vmem_need = (2 * tm * H * x_bytes                  # x rows
                 + 2 * H * H * x_bytes                 # dense weight (resident)
                 + 2 * 3 * 8 * max(H, 128) * 4         # dense bias, LN gamma/beta
                 + 2 * H * tv * dec_bytes              # decoder weight slice [H, TV]
                 + 2 * 8 * max(tv, 128) * 4            # decoder bias slice
                 + 2 * tm * tv * out_bytes             # output tile
                 + tm * H * dec_bytes)                 # transform scratch
    vmem_limit = int(min(max(vmem_need * 5 // 4 + (2 << 20), 32 * 1024 * 1024),
                         vmem_cap * 7 // 8))

    # Bytes count what the kernel actually streams: decoder weights + bias are
    # re-read once per row tile; output is the padded slab.
    restream = Mp // tm
    cost = pl.CostEstimate(
        flops=2 * Mp * H * H + 2 * Mp * H * Vp,
        transcendentals=Mp * H,
        bytes_accessed=(Mp * H * x_bytes
                        + H * H * x_bytes
                        + restream * (Vp * H * dec_bytes + Vp * 4)
                        + Mp * Vp * out_bytes),
    )

    out = pl.pallas_call(
        functools.partial(lm_head_kernel, eps=eps),
        out_shape=jax.ShapeDtypeStruct((Mp, Vp), out_dtype),
        grid_spec=pltpu.PrefetchScalarGridSpec(
            num_scalar_prefetch=0,
            grid=grid,
            in_specs=[
                pl.BlockSpec((tm, H), lambda i, j: (i, 0)),     # x rows
                pl.BlockSpec((H, H), lambda i, j: (0, 0)),      # dense W [in, out]
                pl.BlockSpec((1, H), lambda i, j: (0, 0)),      # dense b
                pl.BlockSpec((1, H), lambda i, j: (0, 0)),      # LN gamma
                pl.BlockSpec((1, H), lambda i, j: (0, 0)),      # LN beta
                pl.BlockSpec((H, tv), lambda i, j: (0, j)),     # decoder W slice [H, TV]
                pl.BlockSpec((1, tv), lambda i, j: (0, j)),     # decoder bias slice
            ],
            out_specs=pl.BlockSpec((tm, tv), lambda i, j: (i, j)),
            scratch_shapes=[pltpu.VMEM((tm, H), decoder_dtype)],
        ),
        compiler_params=pltpu.CompilerParams(
            dimension_semantics=("parallel", "arbitrary"),
            vmem_limit_bytes=vmem_limit),
        cost_estimate=cost,
    )(x2d, wd_t, bd2, gamma2, beta2, wdec_t, bdec2)

    if Mp != M or Vp != V:
        out = out[:M, :V]
    return out.reshape(B, S, V)


def _reference(hidden_states, params, eps=1e-12,
               transform_dtype=None, decoder_dtype=None):
    """Pure-JAX reference. Optional dtypes mimic the kernel's narrow-precision
    matmul operands (f32 accumulation, f32 gelu/LayerNorm)."""
    x = hidden_states
    wd = params["dense_w"]
    if transform_dtype is not None:
        x = x.astype(transform_dtype)
        wd = wd.astype(transform_dtype)
    h = jnp.einsum("bsh,oh->bso", x, wd,
                   preferred_element_type=jnp.float32) + params["dense_b"]
    h = h * 0.5 * (1.0 + lax.erf(h / math.sqrt(2.0)))
    mean = jnp.mean(h, axis=-1, keepdims=True)
    var = jnp.mean(jnp.square(h - mean), axis=-1, keepdims=True)
    h = (h - mean) * lax.rsqrt(var + eps)
    h = h * params["ln_gamma"] + params["ln_beta"]
    w = params["decoder_w"]
    if decoder_dtype is not None:
        h = h.astype(decoder_dtype)
        w = w.astype(decoder_dtype)
    logits = jnp.einsum("bsh,vh->bsv", h, w,
                        preferred_element_type=jnp.float32) + params["decoder_b"]
    return logits


def _make_params(key, H, V):
    k_wd, k_bd, k_g, k_b, k_emb = jax.random.split(key, 5)
    return {
        "dense_w": jax.random.normal(k_wd, (H, H), dtype=jnp.float32) * 0.05,
        "dense_b": jax.random.normal(k_bd, (H,), dtype=jnp.float32) * 0.01,
        "ln_gamma": 1.0 + 0.1 * jax.random.normal(k_g, (H,), dtype=jnp.float32),
        "ln_beta": 0.1 * jax.random.normal(k_b, (H,), dtype=jnp.float32),
        "decoder_w": jax.random.normal(k_emb, (V, H), dtype=jnp.float32) * 0.05,
        "decoder_b": jnp.zeros((V,), dtype=jnp.float32),  # head bias init to zeros
    }


if __name__ == "__main__":
    key = jax.random.PRNGKey(0)
    k_x1, k_p1, k_x2, k_p2 = jax.random.split(key, 4)

    # --- test 1: small aligned shapes, pure-f32 path (tight tolerance vs torch semantics) ---
    B, S, H, V = 2, 8, 32, 256
    hidden_states = jax.random.normal(k_x1, (B, S, H), dtype=jnp.float32)
    params = _make_params(k_p1, H, V)

    out_f32 = bert_lm_prediction_head(hidden_states, params,
                                      transform_dtype=jnp.float32,
                                      decoder_dtype=jnp.float32)
    out_f32 = jax.block_until_ready(out_f32)
    ref_f32 = _reference(hidden_states, params)
    assert out_f32.shape == (B, S, V), out_f32.shape
    assert jnp.allclose(out_f32, ref_f32, atol=1e-4, rtol=1e-4), \
        float(jnp.max(jnp.abs(out_f32 - ref_f32)))

    # --- test 2: default bf16 operand streams (f32 accumulation), vs bf16-mimicking ref ---
    out_bf16 = bert_lm_prediction_head(hidden_states, params)
    out_bf16 = jax.block_until_ready(out_bf16)
    ref_bf16 = _reference(hidden_states, params,
                          transform_dtype=jnp.bfloat16, decoder_dtype=jnp.bfloat16)
    assert out_bf16.dtype == hidden_states.dtype
    assert jnp.allclose(out_bf16, ref_bf16, atol=2e-2, rtol=2e-2), \
        float(jnp.max(jnp.abs(out_bf16 - ref_bf16)))

    # --- test 3: bf16 logits output (halved writeback stream) ---
    out_b16o = bert_lm_prediction_head(hidden_states, params, out_dtype=jnp.bfloat16)
    out_b16o = jax.block_until_ready(out_b16o)
    assert out_b16o.dtype == jnp.bfloat16
    assert jnp.allclose(out_b16o.astype(jnp.float32), ref_bf16, atol=3e-2, rtol=3e-2), \
        float(jnp.max(jnp.abs(out_b16o.astype(jnp.float32) - ref_bf16)))

    # --- test 4: ragged shapes (M not multiple of 8, V not multiple of 128) ---
    B2, S2, H2, V2 = 2, 5, 32, 200
    hidden_states2 = jax.random.normal(k_x2, (B2, S2, H2), dtype=jnp.float32)
    params2 = _make_params(k_p2, H2, V2)

    out2 = bert_lm_prediction_head(hidden_states2, params2,
                                   transform_dtype=jnp.float32,
                                   decoder_dtype=jnp.float32)
    out2 = jax.block_until_ready(out2)
    ref2 = _reference(hidden_states2, params2)
    assert out2.shape == (B2, S2, V2), out2.shape
    assert jnp.allclose(out2, ref2, atol=1e-4, rtol=1e-4), \
        float(jnp.max(jnp.abs(out2 - ref2)))

    print("KERNEL_OK")
</pallas_src>

<mosaic_0001>
module attributes {stable_mosaic.version = 11 : i64} {
  func.func @lm_head_kernel(%arg0: i32, %arg1: i32, %arg2: memref<16x32xf32, #tpu.memory_space<vmem>>, %arg3: memref<32x32xf32, #tpu.memory_space<vmem>>, %arg4: memref<1x32xf32, #tpu.memory_space<vmem>>, %arg5: memref<1x32xf32, #tpu.memory_space<vmem>>, %arg6: memref<1x32xf32, #tpu.memory_space<vmem>>, %arg7: memref<32x256xf32, #tpu.memory_space<vmem>>, %arg8: memref<1x256xf32, #tpu.memory_space<vmem>>, %arg9: memref<16x256xf32, #tpu.memory_space<vmem>>, %arg10: memref<16x32xf32, #tpu.memory_space<vmem>>) attributes {dimension_semantics = [#tpu.dimension_semantics<parallel>, #tpu.dimension_semantics<arbitrary>], iteration_bounds = array<i64: 1, 1>, scalar_prefetch = 0 : i64, scratch_operands = 1 : i64, tpu.core_type = #tpu.core_type<tc>, window_params = [{transform_indices = @transform_0, window_bounds = array<i64: 16, 32>}, {pipeline_mode = #tpu.pipeline_mode<synchronous>, transform_indices = @transform_1, window_bounds = array<i64: 32, 32>}, {pipeline_mode = #tpu.pipeline_mode<synchronous>, transform_indices = @transform_2, window_bounds = array<i64: 1, 32>}, {pipeline_mode = #tpu.pipeline_mode<synchronous>, transform_indices = @transform_3, window_bounds = array<i64: 1, 32>}, {pipeline_mode = #tpu.pipeline_mode<synchronous>, transform_indices = @transform_4, window_bounds = array<i64: 1, 32>}, {transform_indices = @transform_5, window_bounds = array<i64: 32, 256>}, {transform_indices = @transform_6, window_bounds = array<i64: 1, 256>}, {transform_indices = @transform_7, window_bounds = array<i64: 16, 256>}]} {
    %c0_i32 = arith.constant 0 : i32
    %0 = arith.cmpi eq, %arg1, %c0_i32 : i32
    %1 = arith.extui %0 : i1 to i32
    %c0_i32_0 = arith.constant 0 : i32
    %2 = arith.cmpi ne, %1, %c0_i32_0 : i32
    scf.if %2 {
      %c0_8 = arith.constant 0 : index
      %c0_9 = arith.constant 0 : index
      %10 = vector.load %arg2[%c0_8, %c0_9] : memref<16x32xf32, #tpu.memory_space<vmem>>, vector<16x32xf32>
      %c0_10 = arith.constant 0 : index
      %c0_11 = arith.constant 0 : index
      %11 = vector.load %arg3[%c0_10, %c0_11] : memref<32x32xf32, #tpu.memory_space<vmem>>, vector<32x32xf32>
      %cst_12 = arith.constant dense<0.000000e+00> : vector<16x32xf32>
      %12 = tpu.matmul %10, %11, %cst_12 {dimension_numbers = #tpu.dot_dimension_numbers<[1], [0], [0], [1], [0, 0, 1, 1], [], []>} : vector<16x32xf32>, vector<32x32xf32>, vector<16x32xf32> -> vector<16x32xf32>
      %c0_13 = arith.constant 0 : index
      %c0_14 = arith.constant 0 : index
      %13 = vector.load %arg4[%c0_13, %c0_14] : memref<1x32xf32, #tpu.memory_space<vmem>>, vector<1x32xf32>
      %14 = vector.broadcast %13 : vector<1x32xf32> to vector<16x32xf32>
      %15 = arith.addf %12, %14 : vector<16x32xf32>
      %cst_15 = arith.constant 5.000000e-01 : f32
      %16 = vector.broadcast %cst_15 : f32 to vector<16x32xf32>
      %17 = arith.mulf %15, %16 : vector<16x32xf32>
      %cst_16 = arith.constant 1.41421354 : f32
      %18 = vector.broadcast %cst_16 : f32 to vector<16x32xf32>
      %19 = arith.divf %15, %18 : vector<16x32xf32>
      %20 = math.erf %19 : vector<16x32xf32>
      %cst_17 = arith.constant 1.000000e+00 : f32
      %21 = vector.broadcast %cst_17 : f32 to vector<16x32xf32>
      %22 = arith.addf %21, %20 : vector<16x32xf32>
      %23 = arith.mulf %17, %22 : vector<16x32xf32>
      %cst_18 = arith.constant dense<0.000000e+00> : vector<16xf32>
      %24 = vector.multi_reduction <add>, %23, %cst_18 [1] : vector<16x32xf32> to vector<16xf32>
      %25 = vector.shape_cast %24 : vector<16xf32> to vector<16x1xf32>
      %cst_19 = arith.constant 3.200000e+01 : f32
      %26 = vector.broadcast %cst_19 : f32 to vector<16x1xf32>
      %27 = arith.divf %25, %26 : vector<16x1xf32>
      %28 = vector.broadcast %27 : vector<16x1xf32> to vector<16x32xf32>
      %29 = arith.subf %23, %28 : vector<16x32xf32>
      %30 = arith.mulf %29, %29 : vector<16x32xf32>
      %cst_20 = arith.constant dense<0.000000e+00> : vector<16xf32>
      %31 = vector.multi_reduction <add>, %30, %cst_20 [1] : vector<16x32xf32> to vector<16xf32>
      %32 = vector.shape_cast %31 : vector<16xf32> to vector<16x1xf32>
      %cst_21 = arith.constant 3.200000e+01 : f32
      %33 = vector.broadcast %cst_21 : f32 to vector<16x1xf32>
      %34 = arith.divf %32, %33 : vector<16x1xf32>
      %35 = vector.broadcast %27 : vector<16x1xf32> to vector<16x32xf32>
      %36 = arith.subf %23, %35 : vector<16x32xf32>
      %cst_22 = arith.constant 9.99999996E-13 : f32
      %37 = vector.broadcast %cst_22 : f32 to vector<16x1xf32>
      %38 = arith.addf %34, %37 : vector<16x1xf32>
      %39 = math.rsqrt %38 : vector<16x1xf32>
      %40 = vector.broadcast %39 : vector<16x1xf32> to vector<16x32xf32>
      %41 = arith.mulf %36, %40 : vector<16x32xf32>
      %c0_23 = arith.constant 0 : index
      %c0_24 = arith.constant 0 : index
      %42 = vector.load %arg5[%c0_23, %c0_24] : memref<1x32xf32, #tpu.memory_space<vmem>>, vector<1x32xf32>
      %43 = vector.broadcast %42 : vector<1x32xf32> to vector<16x32xf32>
      %44 = arith.mulf %41, %43 : vector<16x32xf32>
      %c0_25 = arith.constant 0 : index
      %c0_26 = arith.constant 0 : index
      %45 = vector.load %arg6[%c0_25, %c0_26] : memref<1x32xf32, #tpu.memory_space<vmem>>, vector<1x32xf32>
      %46 = vector.broadcast %45 : vector<1x32xf32> to vector<16x32xf32>
      %47 = arith.addf %44, %46 : vector<16x32xf32>
      %c0_27 = arith.constant 0 : index
      %c0_28 = arith.constant 0 : index
      %48 = vector.load %arg10[%c0_27, %c0_28] : memref<16x32xf32, #tpu.memory_space<vmem>>, vector<16x32xf32>
      tpu.vector_store %arg10[%c0_27, %c0_28], %47 {strides = array<i32>} : memref<16x32xf32, #tpu.memory_space<vmem>>, vector<16x32xf32>,
    } else {
    }
    %c0 = arith.constant 0 : index
    %c0_1 = arith.constant 0 : index
    %3 = vector.load %arg10[%c0, %c0_1] : memref<16x32xf32, #tpu.memory_space<vmem>>, vector<16x32xf32>
    %c0_2 = arith.constant 0 : index
    %c0_3 = arith.constant 0 : index
    %4 = vector.load %arg7[%c0_2, %c0_3] : memref<32x256xf32, #tpu.memory_space<vmem>>, vector<32x256xf32>
    %cst = arith.constant dense<0.000000e+00> : vector<16x256xf32>
    %5 = tpu.matmul %3, %4, %cst {dimension_numbers = #tpu.dot_dimension_numbers<[1], [0], [0], [1], [0, 0, 1, 1], [], []>} : vector<16x32xf32>, vector<32x256xf32>, vector<16x256xf32> -> vector<16x256xf32>
    %c0_4 = arith.constant 0 : index
    %c0_5 = arith.constant 0 : index
    %6 = vector.load %arg8[%c0_4, %c0_5] : memref<1x256xf32, #tpu.memory_space<vmem>>, vector<1x256xf32>
    %7 = vector.broadcast %6 : vector<1x256xf32> to vector<16x256xf32>
    %8 = arith.addf %5, %7 : vector<16x256xf32>
    %c0_6 = arith.constant 0 : index
    %c0_7 = arith.constant 0 : index
    %9 = vector.load %arg9[%c0_6, %c0_7] : memref<16x256xf32, #tpu.memory_space<vmem>>, vector<16x256xf32>
    tpu.vector_store %arg9[%c0_6, %c0_7], %8 {strides = array<i32>} : memref<16x256xf32, #tpu.memory_space<vmem>>, vector<16x256xf32>,
    return
  }
  func.func @transform_0(%arg0: i32, %arg1: i32) -> (i32, i32) {
    %c0_i32 = arith.constant 0 : i32
    %c0_i32_0 = arith.constant 0 : i32
    return %arg0, %c0_i32 : i32, i32
  }
  func.func @transform_1(%arg0: i32, %arg1: i32) -> (i32, i32) {
    %c0_i32 = arith.constant 0 : i32
    %c0_i32_0 = arith.constant 0 : i32
    %c0_i32_1 = arith.constant 0 : i32
    return %c0_i32, %c0_i32_0 : i32, i32
  }
  func.func @transform_2(%arg0: i32, %arg1: i32) -> (i32, i32) {
    %c0_i32 = arith.constant 0 : i32
    %c0_i32_0 = arith.constant 0 : i32
    %c0_i32_1 = arith.constant 0 : i32
    return %c0_i32, %c0_i32_0 : i32, i32
  }
  func.func @transform_3(%arg0: i32, %arg1: i32) -> (i32, i32) {
    %c0_i32 = arith.constant 0 : i32
    %c0_i32_0 = arith.constant 0 : i32
    %c0_i32_1 = arith.constant 0 : i32
    return %c0_i32, %c0_i32_0 : i32, i32
  }
  func.func @transform_4(%arg0: i32, %arg1: i32) -> (i32, i32) {
    %c0_i32 = arith.constant 0 : i32
    %c0_i32_0 = arith.constant 0 : i32
    %c0_i32_1 = arith.constant 0 : i32
    return %c0_i32, %c0_i32_0 : i32, i32
  }
  func.func @transform_5(%arg0: i32, %arg1: i32) -> (i32, i32) {
    %c0_i32 = arith.constant 0 : i32
    %c0_i32_0 = arith.constant 0 : i32
    return %c0_i32, %arg1 : i32, i32
  }
  func.func @transform_6(%arg0: i32, %arg1: i32) -> (i32, i32) {
    %c0_i32 = arith.constant 0 : i32
    %c0_i32_0 = arith.constant 0 : i32
    return %c0_i32, %arg1 : i32, i32
  }
  func.func @transform_7(%arg0: i32, %arg1: i32) -> (i32, i32) {
    %c0_i32 = arith.constant 0 : i32
    return %arg0, %arg1 : i32, i32
  }
}

</mosaic_0001>

<llo_original>
// kernel: tpu_custom_call.1
$region0: #{tpu_custom_call.1}
  #allocation0 [shape = 'u32[]', space=smem, size = 0x4, offset = 0x4, fixed_abs, tag = 'smem constant byte address 0x4 - core index']
  #allocation1 [shape = 'u32[144,128]{1,0:T(1,128)}', space=vmem, size = 0x12000, scoped, tag = 'internal scratch']
  #allocation2 [shape = 'f32[16,32]{1,0:T(8,128)}', space=vmem, size = 0x2000, scoped, tag = 'scratch operand']
  %s0 = inlined_call_operand.hbm [shape: f32[16,32], index: 0, kind: input, shape index: {}]
  %s1 = inlined_call_operand.hbm [shape: f32[32,32], index: 1, kind: input, shape index: {}]
  %s2 = inlined_call_operand.vmem [shape: f32[1,32], index: 2, kind: input, shape index: {}]
  %s3 = inlined_call_operand.vmem [shape: f32[1,32], index: 3, kind: input, shape index: {}]
  %s4 = inlined_call_operand.vmem [shape: f32[1,32], index: 4, kind: input, shape index: {}]
  %s5 = inlined_call_operand.hbm [shape: f32[32,256], index: 5, kind: input, shape index: {}]
  %s6 = inlined_call_operand.vmem [shape: f32[1,256], index: 6, kind: input, shape index: {}]
  %s7 = inlined_call_operand.hbm [shape: f32[16,256], index: 7, kind: output, shape index: {}]
  %s8 = sld [smem:[#allocation0]]
  $region54: #{tpu_custom_call.1} parent=0
    _
  %s10 = ssub.s32 1, %s8
  %s11 = scalar_select 0, %s10, %s8
  $region1: #{tpu_custom_call.1} parent=0
    #allocation3 [shape = 'u8[8192]{0}', space=vmem, size = 0x2000, scoped, tag = 'input window, operand 0, single buffered']
    #allocation4 [shape = 's32[1]{0}', space=sflag, size = 0x4, scoped, tag = 'scoped memory for tpu_custom_call.1']
    #allocation5 [shape = 's32[1]{0}', space=sflag, size = 0x4, scoped, tag = 'scoped memory for tpu_custom_call.1']
    #allocation6 [shape = 'u8[16384]{0}', space=vmem, size = 0x4000, scoped, tag = 'input window, operand 1, single buffered']
    #allocation7 [shape = 's32[1]{0}', space=sflag, size = 0x4, scoped, tag = 'scoped memory for tpu_custom_call.1']
    #allocation8 [shape = 'u8[32768]{0}', space=vmem, size = 0x8000, scoped, tag = 'input window, operand 5, single buffered']
    #allocation9 [shape = 'u8[16384]{0}', space=vmem, size = 0x4000, scoped, tag = 'output window, operand 0, single buffered']
    %12 = vsyncpa [#allocation4], 0
    %13 = vsyncpa [#allocation7], 0
    %14 = vsyncpa [#allocation5], 0
    // Predicated region
    $region2: #{tpu_custom_call.1} parent=1 // pred_check
      _
    $region3: #{tpu_custom_call.1} parent=1 // pred_check_branch
      %16 = sbr.rel (0) target = $region5
    $region4: #{tpu_custom_call.1} parent=1 // pred_region
      %s18 = ssub.s32 256, 256
      %19 = vsyncadd [#allocation4], %s18
      %s20 = sshll.u32 [#allocation3], 4
      %s21 = int_to_ptr.vmem [resolvable:$true] %s20
      %26 = dma.hbm_to_vmem [thread:$0]  %s0, 256, %s21, [#allocation4], 128, 128, 8
    $region5: #{tpu_custom_call.1} parent=1 // pred_fallthru
      _
    // Predicated region
    $region6: #{tpu_custom_call.1} parent=1 // pred_check
      _
    $region7: #{tpu_custom_call.1} parent=1 // pred_check_branch
      %28 = sbr.rel (0) target = $region9
    $region8: #{tpu_custom_call.1} parent=1 // pred_region
      %s30 = ssub.s32 512, 512
      %31 = vsyncadd [#allocation7], %s30
      %s32 = sshll.u32 [#allocation6], 4
      %s33 = int_to_ptr.vmem [resolvable:$true] %s32
      %38 = dma.hbm_to_vmem [thread:$0]  %s1, 512, %s33, [#allocation7], 128, 128, 8
    $region9: #{tpu_custom_call.1} parent=1 // pred_fallthru
      _
    // Predicated region
    $region10: #{tpu_custom_call.1} parent=1 // pred_check
      _
    $region11: #{tpu_custom_call.1} parent=1 // pred_check_branch
      %40 = sbr.rel (0) target = $region13
    $region12: #{tpu_custom_call.1} parent=1 // pred_region
      _
    $region13: #{tpu_custom_call.1} parent=1 // pred_fallthru
      _
    // Predicated region
    $region14: #{tpu_custom_call.1} parent=1 // pred_check
      _
    $region15: #{tpu_custom_call.1} parent=1 // pred_check_branch
      %42 = sbr.rel (0) target = $region17
    $region16: #{tpu_custom_call.1} parent=1 // pred_region
      _
    $region17: #{tpu_custom_call.1} parent=1 // pred_fallthru
      _
    // Predicated region
    $region18: #{tpu_custom_call.1} parent=1 // pred_check
      _
    $region19: #{tpu_custom_call.1} parent=1 // pred_check_branch
      %44 = sbr.rel (0) target = $region21
    $region20: #{tpu_custom_call.1} parent=1 // pred_region
      _
    $region21: #{tpu_custom_call.1} parent=1 // pred_fallthru
      _
    // Predicated region
    $region22: #{tpu_custom_call.1} parent=1 // pred_check
      _
    $region23: #{tpu_custom_call.1} parent=1 // pred_check_branch
      %46 = sbr.rel (0) target = $region25
    $region24: #{tpu_custom_call.1} parent=1 // pred_region
      %s48 = ssub.s32 1024, 1024
      %49 = vsyncadd [#allocation7], %s48
      %s50 = sshll.u32 [#allocation8], 4
      %s51 = int_to_ptr.vmem [resolvable:$true] %s50
      %56 = dma.hbm_to_vmem [thread:$0]  %s5, 1024, %s51, [#allocation7], 256, 256, 16
    $region25: #{tpu_custom_call.1} parent=1 // pred_fallthru
      _
    // Predicated region
    $region26: #{tpu_custom_call.1} parent=1 // pred_check
      _
    $region27: #{tpu_custom_call.1} parent=1 // pred_check_branch
      %58 = sbr.rel (0) target = $region29
    $region28: #{tpu_custom_call.1} parent=1 // pred_region
      _
    $region29: #{tpu_custom_call.1} parent=1 // pred_fallthru
      _
    // Predicated region
    $region30: #{tpu_custom_call.1} parent=1 // pred_check
      _
    $region31: #{tpu_custom_call.1} parent=1 // pred_check_branch
      %60 = sbr.rel (0) target = $region33
    $region32: #{tpu_custom_call.1} parent=1 // pred_region
      %61 = dma.done [#allocation4], 256
    $region33: #{tpu_custom_call.1} parent=1 // pred_fallthru
      _
    // Predicated region
    $region34: #{tpu_custom_call.1} parent=1 // pred_check
      _
    $region35: #{tpu_custom_call.1} parent=1 // pred_check_branch
      %63 = sbr.rel (0) target = $region37
    $region36: #{tpu_custom_call.1} parent=1 // pred_region
      %64 = dma.done [#allocation7], 512
    $region37: #{tpu_custom_call.1} parent=1 // pred_fallthru
      _
    // Predicated region
    $region38: #{tpu_custom_call.1} parent=1 // pred_check
      _
    $region39: #{tpu_custom_call.1} parent=1 // pred_check_branch
      %66 = sbr.rel (0) target = $region41
    $region40: #{tpu_custom_call.1} parent=1 // pred_region
      %67 = dma.done [#allocation7], 1024
    $region41: #{tpu_custom_call.1} parent=1 // pred_fallthru
      _
    %p68 = scmp.eq.s32.totalorder 0, 0
    // Predicated region
    $region42: #{tpu_custom_call.1} parent=1 // pred_check
      %p69 = pneg %p68
    $region43: #{tpu_custom_call.1} parent=1 // pred_check_branch
      %71 = sbr.rel (%p69) target = $region45
    $region44: #{tpu_custom_call.1} parent=1 // pred_region
      %v72 = vld [vmem:[#allocation3] sm:$0xff]
      %v73 = vld [vmem:[#allocation3 + $0x8] sm:$0xff]
      %v74 = vld [vmem:[#allocation6] sm:$0xff]
      %v75 = vld [vmem:[#allocation6 + $0x8] sm:$0xff]
      %v76 = vld [vmem:[#allocation6 + $0x10] sm:$0xff]
      %v77 = vld [vmem:[#allocation6 + $0x18] sm:$0xff]
      %v78 = vld [vmem:[%s2] sm:$0x1]
      %v80 = vlaneseq
      %v81 = vshrl.u32 %v80, 7
      %v82 = vsub.s32 0, %v81
      %v83 = vrot.slane %v78, %v82
      %vm85 = vcmask 261120
      %v87 = vsel %vm85, %v72, 0
      %v90 = vsel %vm85, %v73, 0
      %92 = vmatprep.subr.mxu0 0.0
      %93 = vmatpush1.msra.mxu0 0.0
      %94 = vmatprep.subr.mxu0 0.0
      %95 = vmatpush1.msra.mxu0 0.0
      %96 = vmatprep.subr.mxu0 0.0
      %97 = vmatpush1.msra.mxu0 0.0
      %98 = vmatprep.subr.mxu0 0.0
      %99 = vmatpush1.msra.mxu0 0.0
      %100 = vmatprep.subr.mxu0 0.0
      %101 = vmatpush1.msra.mxu0 0.0
      %102 = vmatprep.subr.mxu0 0.0
      %103 = vmatpush1.msra.mxu0 0.0
      %104 = vmatprep.subr.mxu0 0.0
      %105 = vmatpush1.msra.mxu0 0.0
      %106 = vmatprep.subr.mxu0 0.0
      %107 = vmatpush1.msra.mxu0 0.0
      %108 = vmatprep.subr.mxu0 0.0
      %109 = vmatpush1.msra.mxu0 0.0
      %110 = vmatprep.subr.mxu0 0.0
      %111 = vmatpush1.msra.mxu0 0.0
      %112 = vmatprep.subr.mxu0 0.0
      %113 = vmatpush1.msra.mxu0 0.0
      %114 = vmatprep.subr.mxu0 0.0
      %115 = vmatpush1.msra.mxu0 0.0
      %116 = vmatprep.subr.mxu0 0.0
      %117 = vmatpush1.msra.mxu0 %v77
      %118 = vmatprep.subr.mxu0 0.0
      %119 = vmatpush1.msra.mxu0 %v76
      %120 = vmatprep.subr.mxu0 0.0
      %121 = vmatpush1.msra.mxu0 %v75
      %122 = vmatprep.subr.mxu0 0.0
      %123 = vmatpush1.msra.mxu0 %v74
      %124 = vmatprep.subr.mxu0 0.0
      %125 = vmatpush2.msra.mxu0 0.0
      %126 = vmatprep.subr.mxu0 0.0
      %127 = vmatpush2.msra.mxu0 0.0
      %128 = vmatprep.subr.mxu0 0.0
      %129 = vmatpush2.msra.mxu0 0.0
      %130 = vmatprep.subr.mxu0 0.0
      %131 = vmatpush2.msra.mxu0 0.0
      %132 = vmatprep.subr.mxu0 0.0
      %133 = vmatpush2.msra.mxu0 0.0
      %134 = vmatprep.subr.mxu0 0.0
      %135 = vmatpush2.msra.mxu0 0.0
      %136 = vmatprep.subr.mxu0 0.0
      %137 = vmatpush2.msra.mxu0 0.0
      %138 = vmatprep.subr.mxu0 0.0
      %139 = vmatpush2.msra.mxu0 0.0
      %140 = vmatprep.subr.mxu0 0.0
      %141 = vmatpush2.msra.mxu0 0.0
      %142 = vmatprep.subr.mxu0 0.0
      %143 = vmatpush2.msra.mxu0 0.0
      %144 = vmatprep.subr.mxu0 0.0
      %145 = vmatpush2.msra.mxu0 0.0
      %146 = vmatprep.subr.mxu0 0.0
      %147 = vmatpush2.msra.mxu0 0.0
      %148 = vmatprep.subr.mxu0 0.0
      %149 = vmatpush2.msra.mxu0 0.0
      %150 = vmatprep.subr.mxu0 0.0
      %151 = vmatpush2.msra.mxu0 0.0
      %152 = vmatprep.subr.mxu0 0.0
      %153 = vmatpush2.msra.mxu0 0.0
      %154 = vmatprep.subr.mxu0 0.0
      %155 = vmatpush2.msra.mxu0 0.0
      %156 = vmatprep.mubr.f32.mxu0 0.0
      %157 = vmatmul.mubr.f32.gmra.mxu0 %v87
      %v158 = vpop.f32.mrf.mxu0
      %v159 = vadd.f32 %v83, %v158
      %v160 = vpop.f32.mrf.mxu0
      %161 = vmatprep.mubr.f32.mxu0 0.0
      %162 = vmatmul.mubr.f32.gmra.mxu0 %v90
      %v163 = vpop.f32.mrf.mxu0
      %v164 = vadd.f32 %v83, %v163
      %v165 = vpop.f32.mrf.mxu0
      %166 = vdwg.mxu0
      %v167 = vmul.f32 %v159, 0.5
      %v168 = vmul.f32 %v164, 0.5
      %v169 = vrcp.pop 1.4142135
      %v170 = vmul.f32 %v159, %v169
      %v171 = vmul.f32 %v164, %v169
      %v172 = verf.f32.pop %v170
      %v173 = verf.f32.pop %v171
      %v174 = vadd.f32 %v172, 1.0
      %v175 = vadd.f32 %v173, 1.0
      %v176 = vmul.f32 %v167, %v174
      %v177 = vmul.f32 %v168, %v175
      %v178 = vsel %vm85, %v176, 0.0
      %179 = vadd.xlane.f32.xlu0 %v178
      %v180 = vpop.xlane.xlu0 %179
      %v181 = vsel %vm85, %v177, 0.0
      %182 = vadd.xlane.f32.xlu0 %v181
      %v183 = vpop.xlane.xlu0 %182
      %v184 = vrcp.pop 32.0
      %v185 = vmul.f32 %v180, %v184
      %v186 = vmul.f32 %v183, %v184
      %v187 = vsub.f32 %v176, %v185
      %v188 = vsub.f32 %v177, %v186
      %v189 = vmul.f32 %v187, %v187
      %v190 = vmul.f32 %v188, %v188
      %v191 = vsel %vm85, %v189, 0.0
      %192 = vadd.xlane.f32.xlu0 %v191
      %v193 = vpop.xlane.xlu0 %192
      %v194 = vsel %vm85, %v190, 0.0
      %195 = vadd.xlane.f32.xlu0 %v194
      %v196 = vpop.xlane.xlu0 %195
      %v197 = vmul.f32 %v193, %v184
      %v198 = vmul.f32 %v196, %v184
      %v199 = vadd.f32 %v197, 1e-12
      %v200 = vadd.f32 %v198, 1e-12
      %v201 = vrsqrt.pop %v199
      %v202 = vrsqrt.pop %v200
      %v203 = vmul.f32 %v187, %v201
      %v204 = vmul.f32 %v188, %v202
      %v205 = vld [vmem:[%s3] sm:$0x1]
      %v207 = vlaneseq
      %v208 = vshrl.u32 %v207, 7
      %v209 = vsub.s32 0, %v208
      %v210 = vrot.slane %v205, %v209
      %v212 = vmul.f32 %v203, %v210
      %v213 = vmul.f32 %v204, %v210
      %v214 = vld [vmem:[%s4] sm:$0x1]
      %v216 = vlaneseq
      %v217 = vshrl.u32 %v216, 7
      %v218 = vsub.s32 0, %v217
      %v219 = vrot.slane %v214, %v218
      %v221 = vadd.f32 %v212, %v219
      %v222 = vadd.f32 %v213, %v219
      %223 = vst.msk [vmem:[#allocation2] sm:$0xff] %vm85, %v221
      %224 = vst.msk [vmem:[#allocation2 + $0x8] sm:$0xff] %vm85, %v222
    $region45: #{tpu_custom_call.1} parent=1 // pred_fallthru
      _
    %v225 = vld [vmem:[#allocation2] sm:$0xff]
    %v226 = vld [vmem:[#allocation2 + $0x8] sm:$0xff]
    %v227 = vld [vmem:[#allocation8] sm:$0xff]
    %v228 = vld [vmem:[#allocation8 + $0x8] sm:$0xff]
    %v229 = vld [vmem:[#allocation8 + $0x10] sm:$0xff]
    %v230 = vld [vmem:[#allocation8 + $0x18] sm:$0xff]
    %v231 = vld [vmem:[#allocation8 + $0x20] sm:$0xff]
    %v232 = vld [vmem:[#allocation8 + $0x28] sm:$0xff]
    %v233 = vld [vmem:[#allocation8 + $0x30] sm:$0xff]
    %v234 = vld [vmem:[#allocation8 + $0x38] sm:$0xff]
    %v235 = vld [vmem:[%s6] sm:$0x3]
    %v237 = vlaneseq
    %v238 = vshrl.u32 %v237, 7
    %v239 = vsub.s32 0, %v238
    %v240 = vrot.slane %v235, %v239
    %v241 = vlaneseq
    %v242 = vshrl.u32 %v241, 7
    %v243 = vsub.s32 1, %v242
    %v244 = vrot.slane %v235, %v243
    %vm247 = vcmask 261120
    %v249 = vsel %vm247, %v225, 0
    %v252 = vsel %vm247, %v226, 0
    %254 = vmatprep.subr.mxu0 0.0
    %255 = vmatpush1.msra.mxu0 0.0
    %256 = vmatprep.subr.mxu0 0.0
    %257 = vmatpush1.msra.mxu0 0.0
    %258 = vmatprep.subr.mxu0 0.0
    %259 = vmatpush1.msra.mxu0 0.0
    %260 = vmatprep.subr.mxu0 0.0
    %261 = vmatpush1.msra.mxu0 0.0
    %262 = vmatprep.subr.mxu0 0.0
    %263 = vmatpush1.msra.mxu0 0.0
    %264 = vmatprep.subr.mxu0 0.0
    %265 = vmatpush1.msra.mxu0 0.0
    %266 = vmatprep.subr.mxu0 0.0
    %267 = vmatpush1.msra.mxu0 0.0
    %268 = vmatprep.subr.mxu0 0.0
    %269 = vmatpush1.msra.mxu0 0.0
    %270 = vmatprep.subr.mxu0 0.0
    %271 = vmatpush1.msra.mxu0 0.0
    %272 = vmatprep.subr.mxu0 0.0
    %273 = vmatpush1.msra.mxu0 0.0
    %274 = vmatprep.subr.mxu0 0.0
    %275 = vmatpush1.msra.mxu0 0.0
    %276 = vmatprep.subr.mxu0 0.0
    %277 = vmatpush1.msra.mxu0 0.0
    %278 = vmatprep.subr.mxu0 %v234
    %279 = vmatpush1.msra.mxu0 %v233
    %280 = vmatprep.subr.mxu0 %v232
    %281 = vmatpush1.msra.mxu0 %v231
    %282 = vmatprep.subr.mxu0 %v230
    %283 = vmatpush1.msra.mxu0 %v229
    %284 = vmatprep.subr.mxu0 %v228
    %285 = vmatpush1.msra.mxu0 %v227
    %286 = vmatprep.subr.mxu0 0.0
    %287 = vmatpush2.msra.mxu0 0.0
    %288 = vmatprep.subr.mxu0 0.0
    %289 = vmatpush2.msra.mxu0 0.0
    %290 = vmatprep.subr.mxu0 0.0
    %291 = vmatpush2.msra.mxu0 0.0
    %292 = vmatprep.subr.mxu0 0.0
    %293 = vmatpush2.msra.mxu0 0.0
    %294 = vmatprep.subr.mxu0 0.0
    %295 = vmatpush2.msra.mxu0 0.0
    %296 = vmatprep.subr.mxu0 0.0
    %297 = vmatpush2.msra.mxu0 0.0
    %298 = vmatprep.subr.mxu0 0.0
    %299 = vmatpush2.msra.mxu0 0.0
    %300 = vmatprep.subr.mxu0 0.0
    %301 = vmatpush2.msra.mxu0 0.0
    %302 = vmatprep.subr.mxu0 0.0
    %303 = vmatpush2.msra.mxu0 0.0
    %304 = vmatprep.subr.mxu0 0.0
    %305 = vmatpush2.msra.mxu0 0.0
    %306 = vmatprep.subr.mxu0 0.0
    %307 = vmatpush2.msra.mxu0 0.0
    %308 = vmatprep.subr.mxu0 0.0
    %309 = vmatpush2.msra.mxu0 0.0
    %310 = vmatprep.subr.mxu0 0.0
    %311 = vmatpush2.msra.mxu0 0.0
    %312 = vmatprep.subr.mxu0 0.0
    %313 = vmatpush2.msra.mxu0 0.0
    %314 = vmatprep.subr.mxu0 0.0
    %315 = vmatpush2.msra.mxu0 0.0
    %316 = vmatprep.subr.mxu0 0.0
    %317 = vmatpush2.msra.mxu0 0.0
    %318 = vmatprep.mubr.f32.mxu0 0.0
    %319 = vmatmul.mubr.f32.gmra.mxu0 %v249
    %v320 = vpop.f32.mrf.mxu0
    %v321 = vadd.f32 %v240, %v320
    %v322 = vpop.f32.mrf.mxu0
    %v323 = vadd.f32 %v244, %v322
    %324 = vmatprep.mubr.f32.mxu0 0.0
    %325 = vmatmul.mubr.f32.gmra.mxu0 %v252
    %v326 = vpop.f32.mrf.mxu0
    %v327 = vadd.f32 %v240, %v326
    %v328 = vpop.f32.mrf.mxu0
    %v329 = vadd.f32 %v244, %v328
    %330 = vdwg.mxu0
    %331 = vst [vmem:[#allocation9] sm:$0xff] %v321
    %332 = vst [vmem:[#allocation9 + $0x8] sm:$0xff] %v323
    %333 = vst [vmem:[#allocation9 + $0x10] sm:$0xff] %v327
    %334 = vst [vmem:[#allocation9 + $0x18] sm:$0xff] %v329
    // Predicated region
    $region46: #{tpu_custom_call.1} parent=1 // pred_check
      _
    $region47: #{tpu_custom_call.1} parent=1 // pred_check_branch
      %336 = sbr.rel (0) target = $region49
    $region48: #{tpu_custom_call.1} parent=1 // pred_region
      %s338 = ssub.s32 512, 512
      %339 = vsyncadd [#allocation5], %s338
      %s340 = sshll.u32 [#allocation9], 4
      %s341 = int_to_ptr.vmem [resolvable:$true] %s340
      %346 = dma.vmem_to_hbm [thread:$0]  %s341, 512, %s7, [#allocation5], 256, 256, 16
    $region49: #{tpu_custom_call.1} parent=1 // pred_fallthru
      _
    // Predicated region
    $region50: #{tpu_custom_call.1} parent=1 // pred_check
      _
    $region51: #{tpu_custom_call.1} parent=1 // pred_check_branch
      %348 = sbr.rel (0) target = $region53
    $region52: #{tpu_custom_call.1} parent=1 // pred_region
      %349 = dma.done [#allocation5], 512
    $region53: #{tpu_custom_call.1} parent=1 // pred_fallthru
      _
    %350 = vsyncpa [#allocation4], 1
    %351 = vsyncpa [#allocation7], 1
    %352 = vsyncpa [#allocation5], 1

</llo_original>
